<compile_context>
chip_gen: v6e
topology: v6e:2x2x1
jax: 0.10.0
libtpu: 0.0.40
codegen_flags: <defaults>
</compile_context>

<pallas_src>
import functools

import jax
import jax.numpy as jnp
from jax.experimental import pallas as pl
from jax.experimental.pallas import tpu as pltpu


_HEAD_LANES = 128  # lane-dense head output: col 0 = estimator (s), col 1 = gnn (y), rest zero pad


def _round_up(n, m):
    return ((n + m - 1) // m) * m


def _pick_tile(n_pad, *, cap=1024, min_blocks=1):
    """Largest tile <= cap dividing n_pad, keeping at least `min_blocks` blocks."""
    for t in (1024, 512, 256, 128):
        if t <= cap and n_pad % t == 0 and n_pad // t >= min_blocks:
            return t
    return 128  # n_pad is always a multiple of 128


def _xw_kernel(x_ref, w1_ref, xw_ref):
    # xw = x @ [W1_est | W1_gnn]  : [TM, F] @ [F, 2H] -> [TM, 2H]  (f32 accumulate on MXU)
    xw_ref[...] = jnp.dot(
        x_ref[...], w1_ref[...], preferred_element_type=jnp.float32
    ).astype(xw_ref.dtype)


def _make_fused_gcn_kernel(tk, xw_resident, compute_dtype):
    def kernel(adj_ref, xw_ref, b1_ref, w2_ref, b2_ref, out_ref, acc_ref):
        # Grid: (row blocks i [parallel], contraction blocks k [arbitrary, last]).
        k = pl.program_id(1)

        @pl.when(k == 0)
        def _():
            acc_ref[...] = jnp.zeros_like(acc_ref)

        # In-kernel cast of the adj tile (no wrapper-side pass over the full adj).
        adj = adj_ref[...].astype(compute_dtype)

        if xw_resident:
            # xw is fully resident in VMEM; slice the contraction chunk for this k.
            start = pl.multiple_of(k * tk, tk)
            xw_k = xw_ref[pl.ds(start, tk), :]
        else:
            xw_k = xw_ref[...]

        # acc += adj[i, k] @ xw[k]  : [TM, TK] @ [TK, 2H] -> [TM, 2H]  (f32 accumulate)
        acc_ref[...] += jnp.dot(adj, xw_k, preferred_element_type=jnp.float32)

        @pl.when(k == pl.num_programs(1) - 1)
        def _():
            # finalize once per row block: bias + ReLU, then both heads via the
            # block-diagonal, lane-padded [2H, 128] head matrix.
            h = jnp.maximum(acc_ref[...] + b1_ref[...], 0.0)
            out = jnp.dot(h, w2_ref[...], preferred_element_type=jnp.float32) + b2_ref[...]
            out_ref[...] = out.astype(out_ref.dtype)

    return kernel


def fair_gnn_forward(adj, x, params, *, compute_dtype=jnp.bfloat16, tm=None, tk=None,
                     vmem_budget_bytes=48 * 1024 * 1024):
    """Returns (y, s) exactly like FairGNN.forward(adj, x).

    adj may be passed in f32 (cast per-tile inside the kernel) or, preferably for
    repeated forwards, already stored in `compute_dtype` (bf16) to halve the
    dominant HBM stream.
    """
    N, F = x.shape
    assert adj.shape == (N, N)
    H = params["est_w1"].shape[1]
    H2 = 2 * H

    # --- pad N up to a multiple of 128 so the tiled/pipelined path always applies ---
    N_pad = _round_up(N, 128)
    if N_pad != N:
        adj = jnp.pad(adj, ((0, N_pad - N), (0, N_pad - N)))
        x = jnp.pad(x, ((0, N_pad - N), (0, 0)))

    if tm is None:
        # keep >= 2 row blocks so both v7x TensorCores get work on the parallel axis
        tm = _pick_tile(N_pad, cap=1024, min_blocks=2)
    if tk is None:
        tk = _pick_tile(N_pad, cap=1024, min_blocks=1)
    assert N_pad % tm == 0 and N_pad % tk == 0, "padded N must be divisible by the tiles"

    # --- pack both branches into one parameter set -------------------------------
    w1 = jnp.concatenate([params["est_w1"], params["gnn_w1"]], axis=1).astype(compute_dtype)  # [F, 2H]
    b1 = jnp.concatenate([params["est_b1"], params["gnn_b1"]], axis=1).astype(jnp.float32)    # [1, 2H]

    w2 = jnp.zeros((H2, _HEAD_LANES), jnp.float32)                 # block-diagonal heads, lane-padded
    w2 = w2.at[:H, 0].set(params["est_w2"][:, 0].astype(jnp.float32))
    w2 = w2.at[H:, 1].set(params["gnn_w2"][:, 0].astype(jnp.float32))
    b2 = jnp.zeros((1, _HEAD_LANES), jnp.float32)
    b2 = b2.at[0, 0].set(params["est_b2"][0, 0].astype(jnp.float32))
    b2 = b2.at[0, 1].set(params["gnn_b2"][0, 0].astype(jnp.float32))

    # --- stage 1: xw = x @ W1_comb (computed once, row-tiled, compute-dtype MXU) --
    xw = pl.pallas_call(
        _xw_kernel,
        out_shape=jax.ShapeDtypeStruct((N_pad, H2), compute_dtype),
        grid_spec=pltpu.PrefetchScalarGridSpec(
            num_scalar_prefetch=0,
            grid=(N_pad // tm,),
            in_specs=[
                pl.BlockSpec((tm, F), lambda i: (i, 0)),
                pl.BlockSpec((F, H2), lambda i: (0, 0)),
            ],
            out_specs=pl.BlockSpec((tm, H2), lambda i: (i, 0)),
        ),
        compiler_params=pltpu.CompilerParams(
            dimension_semantics=("parallel",),
        ),
    )(x.astype(compute_dtype), w1)

    # --- stage 2: single fused adj pass for BOTH branches -------------------------
    itemsize = lambda dt: jnp.dtype(dt).itemsize
    adj_tile_bytes = 2 * tm * tk * itemsize(adj.dtype)          # double-buffered adj tile (stored dtype)
    out_tile_bytes = 2 * tm * _HEAD_LANES * 4                   # double-buffered f32 output block
    acc_bytes = tm * H2 * 4                                     # f32 accumulator scratch
    param_bytes = H2 * _HEAD_LANES * 4 + H2 * 4 + _HEAD_LANES * 4 + (1 << 20)
    xw_resident_bytes = 2 * N_pad * H2 * itemsize(compute_dtype)  # full xw (conservatively 2x buffered)
    xw_stream_bytes = 2 * tk * H2 * itemsize(compute_dtype)

    base_bytes = adj_tile_bytes + out_tile_bytes + acc_bytes + param_bytes
    xw_resident = base_bytes + xw_resident_bytes <= vmem_budget_bytes

    if xw_resident:
        # xw stays resident in VMEM for the whole grid: DMA'd once, never re-streamed.
        xw_spec = pl.BlockSpec((N_pad, H2), lambda i, k: (0, 0))
        vmem_needed = base_bytes + xw_resident_bytes
    else:
        # Fallback for very large graphs: stream the contraction chunk per k.
        xw_spec = pl.BlockSpec((tk, H2), lambda i, k: (k, 0))
        vmem_needed = base_bytes + xw_stream_bytes

    vmem_limit = int(min(max(vmem_needed + (4 << 20), 32 << 20), vmem_budget_bytes))

    kernel = _make_fused_gcn_kernel(tk, xw_resident, compute_dtype)

    out = pl.pallas_call(
        kernel,
        out_shape=jax.ShapeDtypeStruct((N_pad, _HEAD_LANES), jnp.float32),
        grid_spec=pltpu.PrefetchScalarGridSpec(
            num_scalar_prefetch=0,
            grid=(N_pad // tm, N_pad // tk),
            in_specs=[
                pl.BlockSpec((tm, tk), lambda i, k: (i, k)),            # adj tile (dominant stream)
                xw_spec,                                                # xw: resident or streamed
                pl.BlockSpec((1, H2), lambda i, k: (0, 0)),             # b1 (both branches)
                pl.BlockSpec((H2, _HEAD_LANES), lambda i, k: (0, 0)),   # block-diagonal heads
                pl.BlockSpec((1, _HEAD_LANES), lambda i, k: (0, 0)),    # head biases
            ],
            out_specs=pl.BlockSpec((tm, _HEAD_LANES), lambda i, k: (i, 0)),
            scratch_shapes=[pltpu.VMEM((tm, H2), jnp.float32)],
        ),
        compiler_params=pltpu.CompilerParams(
            dimension_semantics=("parallel", "arbitrary"),
            vmem_limit_bytes=vmem_limit,
        ),
    )(adj, xw, b1, w2, b2)

    s = out[:N, 0:1]   # estimator branch
    y = out[:N, 1:2]   # gnn branch
    return y, s


def init_params(key, num_features, num_hidden):
    ks = jax.random.split(key, 8)
    scale = 0.05
    return {
        # estimator GCN: GCNConv(num_features -> num_hidden) + Linear(num_hidden -> 1)
        "est_w1": scale * jax.random.normal(ks[0], (num_features, num_hidden), jnp.float32),
        "est_b1": scale * jax.random.normal(ks[1], (1, num_hidden), jnp.float32),
        "est_w2": scale * jax.random.normal(ks[2], (num_hidden, 1), jnp.float32),
        "est_b2": scale * jax.random.normal(ks[3], (1, 1), jnp.float32),
        # WrappedGNN: GCNConv(num_features -> hidden_dim) + classifier Linear(hidden_dim -> 1)
        "gnn_w1": scale * jax.random.normal(ks[4], (num_features, num_hidden), jnp.float32),
        "gnn_b1": scale * jax.random.normal(ks[5], (1, num_hidden), jnp.float32),
        "gnn_w2": scale * jax.random.normal(ks[6], (num_hidden, 1), jnp.float32),
        "gnn_b2": scale * jax.random.normal(ks[7], (1, 1), jnp.float32),
    }


def _reference_forward(adj, x, p):
    hi = jax.lax.Precision.HIGHEST

    def branch(w1, b1, w2, b2):
        h = jnp.maximum(jnp.dot(adj, jnp.dot(x, w1, precision=hi), precision=hi) + b1, 0.0)
        return jnp.dot(h, w2, precision=hi) + b2

    s = branch(p["est_w1"], p["est_b1"], p["est_w2"], p["est_b2"])
    y = branch(p["gnn_w1"], p["gnn_b1"], p["gnn_w2"], p["gnn_b2"])
    return y, s


if __name__ == "__main__":
    N = 300           # deliberately NOT a multiple of 128 -> exercises the zero-padding path
    F = 32            # num_features
    H = 128           # num_hidden / gnn_config.hidden_dim

    key = jax.random.PRNGKey(0)
    k_adj, k_x, k_p = jax.random.split(key, 3)

    # Symmetric, row-normalized dense adjacency with self loops (GCN-style).
    a = (jax.random.uniform(k_adj, (N, N), jnp.float32) > 0.8).astype(jnp.float32)
    a = jnp.maximum(a, a.T) + jnp.eye(N, dtype=jnp.float32)
    deg = jnp.sum(a, axis=1, keepdims=True)
    adj = a / deg

    x = jax.random.normal(k_x, (N, F), jnp.float32)
    params = init_params(k_p, F, H)

    y_ref, s_ref = _reference_forward(adj, x, params)

    # f32 path: tight check against the high-precision XLA reference.
    y32, s32 = jax.block_until_ready(
        fair_gnn_forward(adj, x, params, compute_dtype=jnp.float32))
    assert y32.shape == (N, 1) and s32.shape == (N, 1)
    assert jnp.allclose(y32, y_ref, atol=2e-3, rtol=2e-3)
    assert jnp.allclose(s32, s_ref, atol=2e-3, rtol=2e-3)

    # bf16 path (default, MXU-optimized): adj stored persistently in bf16 so the
    # dominant HBM stream is 2 bytes/elem; f32 accumulation; relaxed tolerance.
    adj_bf16 = adj.astype(jnp.bfloat16)
    y16, s16 = jax.block_until_ready(
        fair_gnn_forward(adj_bf16, x, params))
    assert y16.shape == (N, 1) and s16.shape == (N, 1)
    assert jnp.allclose(y16, y_ref, atol=2e-2, rtol=2e-2)
    assert jnp.allclose(s16, s_ref, atol=2e-2, rtol=2e-2)

    print("KERNEL_OK")
</pallas_src>

<mosaic_0001>
module attributes {stable_mosaic.version = 11 : i64} {
  func.func @_xw_kernel(%arg0: i32, %arg1: memref<128x32xf32, #tpu.memory_space<vmem>>, %arg2: memref<32x256xf32, #tpu.memory_space<vmem>>, %arg3: memref<128x256xf32, #tpu.memory_space<vmem>>) attributes {dimension_semantics = [#tpu.dimension_semantics<parallel>], iteration_bounds = array<i64: 3>, scalar_prefetch = 0 : i64, scratch_operands = 0 : i64, tpu.core_type = #tpu.core_type<tc>, window_params = [{transform_indices = @transform_0, window_bounds = array<i64: 128, 32>}, {pipeline_mode = #tpu.pipeline_mode<synchronous>, transform_indices = @transform_1, window_bounds = array<i64: 32, 256>}, {transform_indices = @transform_2, window_bounds = array<i64: 128, 256>}]} {
    %c0 = arith.constant 0 : index
    %c0_0 = arith.constant 0 : index
    %0 = vector.load %arg1[%c0, %c0_0] : memref<128x32xf32, #tpu.memory_space<vmem>>, vector<128x32xf32>
    %c0_1 = arith.constant 0 : index
    %c0_2 = arith.constant 0 : index
    %1 = vector.load %arg2[%c0_1, %c0_2] : memref<32x256xf32, #tpu.memory_space<vmem>>, vector<32x256xf32>
    %cst = arith.constant dense<0.000000e+00> : vector<128x256xf32>
    %2 = tpu.matmul %0, %1, %cst {dimension_numbers = #tpu.dot_dimension_numbers<[1], [0], [0], [1], [0, 0, 1, 1], [], []>} : vector<128x32xf32>, vector<32x256xf32>, vector<128x256xf32> -> vector<128x256xf32>
    %c0_3 = arith.constant 0 : index
    %c0_4 = arith.constant 0 : index
    %3 = vector.load %arg3[%c0_3, %c0_4] : memref<128x256xf32, #tpu.memory_space<vmem>>, vector<128x256xf32>
    tpu.vector_store %arg3[%c0_3, %c0_4], %2 {strides = array<i32>} : memref<128x256xf32, #tpu.memory_space<vmem>>, vector<128x256xf32>,
    return
  }
  func.func @transform_0(%arg0: i32) -> (i32, i32) {
    %c0_i32 = arith.constant 0 : i32
    %c0_i32_0 = arith.constant 0 : i32
    return %arg0, %c0_i32 : i32, i32
  }
  func.func @transform_1(%arg0: i32) -> (i32, i32) {
    %c0_i32 = arith.constant 0 : i32
    %c0_i32_0 = arith.constant 0 : i32
    %c0_i32_1 = arith.constant 0 : i32
    return %c0_i32, %c0_i32_0 : i32, i32
  }
  func.func @transform_2(%arg0: i32) -> (i32, i32) {
    %c0_i32 = arith.constant 0 : i32
    %c0_i32_0 = arith.constant 0 : i32
    return %arg0, %c0_i32 : i32, i32
  }
}

</mosaic_0001>

<llo_original>
// kernel: tpu_custom_call.1
$region0: #{tpu_custom_call.1}
  #allocation0 [shape = 'u32[]', space=smem, size = 0x4, offset = 0x4, fixed_abs, tag = 'smem constant byte address 0x4 - core index']
  #allocation1 [shape = 'u32[144,128]{1,0:T(1,128)}', space=vmem, size = 0x12000, scoped, tag = 'internal scratch']
  %s0 = inlined_call_operand.vmem [shape: f32[384,32], index: 0, kind: input, shape index: {}]
  %s1 = inlined_call_operand.vmem [shape: f32[32,256], index: 1, kind: input, shape index: {}]
  %s2 = inlined_call_operand.hbm [shape: f32[384,256], index: 2, kind: output, shape index: {}]
  %s3 = sld [smem:[#allocation0]]
  $region41: #{tpu_custom_call.1} parent=0
    _
  %s5 = ssub.s32 1, %s3
  %s6 = scalar_select 0, %s5, %s3
  $region1: #{tpu_custom_call.1} parent=0
    #allocation2 [shape = 'u8[262144]{0}', space=vmem, size = 0x40000, scoped, tag = 'output window, operand 0']
    #allocation3 [shape = 's32[2]{0}', space=sflag, size = 0x8, scoped, tag = 'scoped memory for tpu_custom_call.1']
    %7 = vsyncpa [#allocation3], 0
    %s8 = scalar_lea.sflag [#allocation3], 1
    %9 = vsyncpa %s8, 0
    loop: start=0, step=1, limit=5
    $region2: #{tpu_custom_call.1} parent=1 // loop_pre_header
      _
    $region3: #{tpu_custom_call.1} parent=1 // loop_header
      %s11 = sphi 0, %s15
      %p12 = scmp.ge.s32.totalorder %s11, 5
      %s21 = sphi 0, %s23
      %s24 = sphi 0, %s21
      %s25 = sphi 0, %s24
      %s41 = sphi 0, %s25
      %s45 = sphi 0, %s45
      %s47 = sphi 0, %s45
      %s48 = sphi 0, %s47
      %s62 = sphi 0, %s48
      %s68 = sphi 0, %s70
      %s71 = sphi 0, %s68
      %s72 = sphi 0, %s71
      %s88 = sphi 0, %s72
    $region4: #{tpu_custom_call.1} parent=1 // loop_header_branch
      %14 = sbr.rel (%p12) target = $region8
    $region5: #{tpu_custom_call.1} parent=1 // loop_body
      %s16 = ssub.s32 %s11, 1
      %s17 = ssub.s32 %s11, 2
      %s18 = sadd.s32 %s11, 1
      %s19 = ssub.s32 %s11, %s18
      %p20 = scmp.eq.s32.totalorder %s19, 0
      %s22 = sadd.s32 %s21, 1
      %s23 = scalar_select %p20, %s21, %s22
      %p26 = pneg %p20
      %p27 = scmp.eq.s32.totalorder %s11, 2
      %p28 = por %p26, %p27
      %p29 = scmp.ne.s32.totalorder %s21, %s24
      %p30 = scmp.eq.s32.totalorder %s11, 0
      %p31 = por %p29, %p30
      %p32 = scmp.ne.s32.totalorder %s21, %s24
      %p33 = scmp.eq.s32.totalorder %s16, 2
      %p34 = por %p32, %p33
      %p35 = scmp.ne.s32.totalorder %s24, %s25
      %p36 = scmp.eq.s32.totalorder %s16, 0
      %p37 = por %p35, %p36
      %p38 = scmp.ne.s32.totalorder %s24, %s25
      %p39 = scmp.eq.s32.totalorder %s17, 2
      %p40 = por %p38, %p39
      %p42 = scmp.ne.s32.totalorder %s25, %s41
      %p43 = scmp.eq.s32.totalorder %s17, 0
      %p44 = por %p42, %p43
      %s46 = sadd.s32 %s45, 1
      %p49 = scmp.eq.s32.totalorder %s11, 2
      %p50 = scmp.ne.s32.totalorder %s45, %s47
      %p51 = scmp.eq.s32.totalorder %s11, 0
      %p52 = por %p50, %p51
      %p53 = scmp.ne.s32.totalorder %s45, %s47
      %p54 = scmp.eq.s32.totalorder %s16, 2
      %p55 = por %p53, %p54
      %p56 = scmp.ne.s32.totalorder %s47, %s48
      %p57 = scmp.eq.s32.totalorder %s16, 0
      %p58 = por %p56, %p57
      %p59 = scmp.ne.s32.totalorder %s47, %s48
      %p60 = scmp.eq.s32.totalorder %s17, 2
      %p61 = por %p59, %p60
      %p63 = scmp.ne.s32.totalorder %s48, %s62
      %p64 = scmp.eq.s32.totalorder %s17, 0
      %p65 = por %p63, %p64
      %s66 = ssub.s32 %s11, %s18
      %p67 = scmp.eq.s32.totalorder %s66, 0
      %s69 = sadd.s32 %s68, 1
      %s70 = scalar_select %p67, %s68, %s69
      %p73 = pneg %p67
      %p74 = scmp.eq.s32.totalorder %s11, 2
      %p75 = por %p73, %p74
      %p76 = scmp.ne.s32.totalorder %s68, %s71
      %p77 = scmp.eq.s32.totalorder %s11, 0
      %p78 = por %p76, %p77
      %p79 = scmp.ne.s32.totalorder %s68, %s71
      %p80 = scmp.eq.s32.totalorder %s16, 2
      %p81 = por %p79, %p80
      %p82 = scmp.ne.s32.totalorder %s71, %s72
      %p83 = scmp.eq.s32.totalorder %s16, 0
      %p84 = por %p82, %p83
      %p85 = scmp.ne.s32.totalorder %s71, %s72
      %p86 = scmp.eq.s32.totalorder %s17, 2
      %p87 = por %p85, %p86
      %p89 = scmp.ne.s32.totalorder %s72, %s88
      %p90 = scmp.eq.s32.totalorder %s17, 0
      %p91 = por %p89, %p90
      %p92 = scmp.le.s32.totalorder 1, %s11
      %p93 = scmp.lt.s32.totalorder %s11, 4
      %p94 = pnand %p92, %p93
      %p95 = pneg %p94
      // Predicated region
      $region9: #{tpu_custom_call.1} parent=5 // pred_check
        _
      $region10: #{tpu_custom_call.1} parent=5 // pred_check_branch
        %97 = sbr.rel (%p94) target = $region12
      $region11: #{tpu_custom_call.1} parent=5 // pred_region
        %s98 = ssub.s32 %s11, 1
        // Predicated region
        $region13: #{tpu_custom_call.1} parent=11 // pred_check
          %p99 = pneg %p58
        $region14: #{tpu_custom_call.1} parent=11 // pred_check_branch
          %101 = sbr.rel (%p99) target = $region16
        $region15: #{tpu_custom_call.1} parent=11 // pred_region
          _
        $region16: #{tpu_custom_call.1} parent=11 // pred_fallthru
          _
      $region12: #{tpu_custom_call.1} parent=5 // pred_fallthru
        _
      %p102 = scmp.lt.s32.totalorder %s11, 3
      // Predicated region
      $region17: #{tpu_custom_call.1} parent=5 // pred_check
        %p103 = pneg %p102
      $region18: #{tpu_custom_call.1} parent=5 // pred_check_branch
        %105 = sbr.rel (%p103) target = $region20
      $region19: #{tpu_custom_call.1} parent=5 // pred_region
        // Predicated region
        $region21: #{tpu_custom_call.1} parent=19 // pred_check
          %p106 = pneg %p31
        $region22: #{tpu_custom_call.1} parent=19 // pred_check_branch
          %108 = sbr.rel (%p106) target = $region24
        $region23: #{tpu_custom_call.1} parent=19 // pred_region
          %s109 = smul.u32 16, %s11
          %p110 = scmp.lt.s32.totalorder %s109, 47
          %s111 = scalar_select %p110, %s109, 47
          %s112 = smul.addr %s111, 8
          %s113 = scalar_lea.vmem %s0, %s112
          %s114 = smul.u32 16, %s11
        $region24: #{tpu_custom_call.1} parent=19 // pred_fallthru
          _
      $region20: #{tpu_custom_call.1} parent=5 // pred_fallthru
        _
      %p115 = scmp.le.s32.totalorder 1, %s11
      %p116 = scmp.lt.s32.totalorder %s11, 4
      %p117 = pnand %p115, %p116
      %p118 = pneg %p117
      // Predicated region
      $region25: #{tpu_custom_call.1} parent=5 // pred_check
        _
      $region26: #{tpu_custom_call.1} parent=5 // pred_check_branch
        %120 = sbr.rel (%p117) target = $region28
      $region27: #{tpu_custom_call.1} parent=5 // pred_region
        %s121 = ssub.s32 %s11, 1
        %s122 = smul.u32 16, %s16
        %p123 = scmp.lt.s32.totalorder %s122, 47
        %s124 = scalar_select %p123, %s122, 47
        %s125 = smul.addr %s124, 8
        %s126 = scalar_lea.vmem %s0, %s125
        %p127 = pneg %p37
        %p128 = pneg %p34
        %p129 = pneg %p58
        %p130 = pneg %p55
        %p131 = pneg %p84
        %p132 = pneg %p81
        %s133 = sand.u32 %s71, 1
        %s134 = scalar_lea.sflag [#allocation3], %s133
        %s135 = sand.u32 %s71, 1
        %s136 = smul.addr %s135, 256
        %s137 = scalar_lea.vmem [#allocation2], %s136
        %s138 = smul.u32 16, %s16
        %p139 = scmp.lt.s32.totalorder %s138, 47
        %s140 = scalar_select %p139, %s138, 47
        %s141 = smul.addr %s140, 8
        %s142 = scalar_lea.vmem %s0, %s141
        %s143 = smul.u32 16, %s16
        %s144 = smul.u32 16, %s16
        %v145 = vld [vmem:[%s142] sm:$0xff]
        %v146 = vld [vmem:[%s142 + $0x8] sm:$0xff]
        %v147 = vld [vmem:[%s142 + $0x10] sm:$0xff]
        %v148 = vld [vmem:[%s142 + $0x18] sm:$0xff]
        %v149 = vld [vmem:[%s142 + $0x20] sm:$0xff]
        %v150 = vld [vmem:[%s142 + $0x28] sm:$0xff]
        %v151 = vld [vmem:[%s142 + $0x30] sm:$0xff]
        %v152 = vld [vmem:[%s142 + $0x38] sm:$0xff]
        %v153 = vld [vmem:[%s142 + $0x40] sm:$0xff]
        %v154 = vld [vmem:[%s142 + $0x48] sm:$0xff]
        %v155 = vld [vmem:[%s142 + $0x50] sm:$0xff]
        %v156 = vld [vmem:[%s142 + $0x58] sm:$0xff]
        %v157 = vld [vmem:[%s142 + $0x60] sm:$0xff]
        %v158 = vld [vmem:[%s142 + $0x68] sm:$0xff]
        %v159 = vld [vmem:[%s142 + $0x70] sm:$0xff]
        %v160 = vld [vmem:[%s142 + $0x78] sm:$0xff]
        %v161 = vld [vmem:[%s1] sm:$0xff]
        %v162 = vld [vmem:[%s1 + $0x8] sm:$0xff]
        %v163 = vld [vmem:[%s1 + $0x10] sm:$0xff]
        %v164 = vld [vmem:[%s1 + $0x18] sm:$0xff]
        %v165 = vld [vmem:[%s1 + $0x20] sm:$0xff]
        %v166 = vld [vmem:[%s1 + $0x28] sm:$0xff]
        %v167 = vld [vmem:[%s1 + $0x30] sm:$0xff]
        %v168 = vld [vmem:[%s1 + $0x38] sm:$0xff]
        %vm169 = vcmask 261120
        %v171 = vsel %vm169, %v145, 0
        %v174 = vsel %vm169, %v146, 0
        %v177 = vsel %vm169, %v147, 0
        %v180 = vsel %vm169, %v148, 0
        %v183 = vsel %vm169, %v149, 0
        %v186 = vsel %vm169, %v150, 0
        %v189 = vsel %vm169, %v151, 0
        %v192 = vsel %vm169, %v152, 0
        %v195 = vsel %vm169, %v153, 0
        %v198 = vsel %vm169, %v154, 0
        %v201 = vsel %vm169, %v155, 0
        %v204 = vsel %vm169, %v156, 0
        %v207 = vsel %vm169, %v157, 0
        %v210 = vsel %vm169, %v158, 0
        %v213 = vsel %vm169, %v159, 0
        %v216 = vsel %vm169, %v160, 0
        %218 = vmatprep.subr.mxu0 0.0
        %219 = vmatpush1.msra.mxu0 0.0
        %220 = vmatprep.subr.mxu0 0.0
        %221 = vmatpush1.msra.mxu0 0.0
        %222 = vmatprep.subr.mxu0 0.0
        %223 = vmatpush1.msra.mxu0 0.0
        %224 = vmatprep.subr.mxu0 0.0
        %225 = vmatpush1.msra.mxu0 0.0
        %226 = vmatprep.subr.mxu0 0.0
        %227 = vmatpush1.msra.mxu0 0.0
        %228 = vmatprep.subr.mxu0 0.0
        %229 = vmatpush1.msra.mxu0 0.0
        %230 = vmatprep.subr.mxu0 0.0
        %231 = vmatpush1.msra.mxu0 0.0
        %232 = vmatprep.subr.mxu0 0.0
        %233 = vmatpush1.msra.mxu0 0.0
        %234 = vmatprep.subr.mxu0 0.0
        %235 = vmatpush1.msra.mxu0 0.0
        %236 = vmatprep.subr.mxu0 0.0
        %237 = vmatpush1.msra.mxu0 0.0
        %238 = vmatprep.subr.mxu0 0.0
        %239 = vmatpush1.msra.mxu0 0.0
        %240 = vmatprep.subr.mxu0 0.0
        %241 = vmatpush1.msra.mxu0 0.0
        %242 = vmatprep.subr.mxu0 %v168
        %243 = vmatpush1.msra.mxu0 %v167
        %244 = vmatprep.subr.mxu0 %v166
        %245 = vmatpush1.msra.mxu0 %v165
        %246 = vmatprep.subr.mxu0 %v164
        %247 = vmatpush1.msra.mxu0 %v163
        %248 = vmatprep.subr.mxu0 %v162
        %249 = vmatpush1.msra.mxu0 %v161
        %250 = vmatprep.subr.mxu0 0.0
        %251 = vmatpush2.msra.mxu0 0.0
        %252 = vmatprep.subr.mxu0 0.0
        %253 = vmatpush2.msra.mxu0 0.0
        %254 = vmatprep.subr.mxu0 0.0
        %255 = vmatpush2.msra.mxu0 0.0
        %256 = vmatprep.subr.mxu0 0.0
        %257 = vmatpush2.msra.mxu0 0.0
        %258 = vmatprep.subr.mxu0 0.0
        %259 = vmatpush2.msra.mxu0 0.0
        %260 = vmatprep.subr.mxu0 0.0
        %261 = vmatpush2.msra.mxu0 0.0
        %262 = vmatprep.subr.mxu0 0.0
        %263 = vmatpush2.msra.mxu0 0.0
        %264 = vmatprep.subr.mxu0 0.0
        %265 = vmatpush2.msra.mxu0 0.0
        %266 = vmatprep.subr.mxu0 0.0
        %267 = vmatpush2.msra.mxu0 0.0
        %268 = vmatprep.subr.mxu0 0.0
        %269 = vmatpush2.msra.mxu0 0.0
        %270 = vmatprep.subr.mxu0 0.0
        %271 = vmatpush2.msra.mxu0 0.0
        %272 = vmatprep.subr.mxu0 0.0
        %273 = vmatpush2.msra.mxu0 0.0
        %274 = vmatprep.subr.mxu0 0.0
        %275 = vmatpush2.msra.mxu0 0.0
        %276 = vmatprep.subr.mxu0 0.0
        %277 = vmatpush2.msra.mxu0 0.0
        %278 = vmatprep.subr.mxu0 0.0
        %279 = vmatpush2.msra.mxu0 0.0
        %280 = vmatprep.subr.mxu0 0.0
        %281 = vmatpush2.msra.mxu0 0.0
        %282 = vmatprep.mubr.f32.mxu0 0.0
        %283 = vmatmul.mubr.f32.gmra.mxu0 %v171
        %v284 = vpop.f32.mrf.mxu0
        %v285 = vadd.f32 0.0, %v284
        %v286 = vpop.f32.mrf.mxu0
        %v287 = vadd.f32 0.0, %v286
        %288 = vmatprep.mubr.f32.mxu0 0.0
        %289 = vmatmul.mubr.f32.gmra.mxu0 %v174
        %v290 = vpop.f32.mrf.mxu0
        %v291 = vadd.f32 0.0, %v290
        %v292 = vpop.f32.mrf.mxu0
        %v293 = vadd.f32 0.0, %v292
        %294 = vmatprep.mubr.f32.mxu0 0.0
        %295 = vmatmul.mubr.f32.gmra.mxu0 %v177
        %v296 = vpop.f32.mrf.mxu0
        %v297 = vadd.f32 0.0, %v296
        %v298 = vpop.f32.mrf.mxu0
        %v299 = vadd.f32 0.0, %v298
        %300 = vmatprep.mubr.f32.mxu0 0.0
        %301 = vmatmul.mubr.f32.gmra.mxu0 %v180
        %v302 = vpop.f32.mrf.mxu0
        %v303 = vadd.f32 0.0, %v302
        %v304 = vpop.f32.mrf.mxu0
        %v305 = vadd.f32 0.0, %v304
        %306 = vmatprep.mubr.f32.mxu0 0.0
        %307 = vmatmul.mubr.f32.gmra.mxu0 %v183
        %v308 = vpop.f32.mrf.mxu0
        %v309 = vadd.f32 0.0, %v308
        %v310 = vpop.f32.mrf.mxu0
        %v311 = vadd.f32 0.0, %v310
        %312 = vmatprep.mubr.f32.mxu0 0.0
        %313 = vmatmul.mubr.f32.gmra.mxu0 %v186
        %v314 = vpop.f32.mrf.mxu0
        %v315 = vadd.f32 0.0, %v314
        %v316 = vpop.f32.mrf.mxu0
        %v317 = vadd.f32 0.0, %v316
        %318 = vmatprep.mubr.f32.mxu0 0.0
        %319 = vmatmul.mubr.f32.gmra.mxu0 %v189
        %v320 = vpop.f32.mrf.mxu0
        %v321 = vadd.f32 0.0, %v320
        %v322 = vpop.f32.mrf.mxu0
        %v323 = vadd.f32 0.0, %v322
        %324 = vmatprep.mubr.f32.mxu0 0.0
        %325 = vmatmul.mubr.f32.gmra.mxu0 %v192
        %v326 = vpop.f32.mrf.mxu0
        %v327 = vadd.f32 0.0, %v326
        %v328 = vpop.f32.mrf.mxu0
        %v329 = vadd.f32 0.0, %v328
        %330 = vmatprep.mubr.f32.mxu0 0.0
        %331 = vmatmul.mubr.f32.gmra.mxu0 %v195
        %v332 = vpop.f32.mrf.mxu0
        %v333 = vadd.f32 0.0, %v332
        %v334 = vpop.f32.mrf.mxu0
        %v335 = vadd.f32 0.0, %v334
        %336 = vmatprep.mubr.f32.mxu0 0.0
        %337 = vmatmul.mubr.f32.gmra.mxu0 %v198
        %v338 = vpop.f32.mrf.mxu0
        %v339 = vadd.f32 0.0, %v338
        %v340 = vpop.f32.mrf.mxu0
        %v341 = vadd.f32 0.0, %v340
        %342 = vmatprep.mubr.f32.mxu0 0.0
        %343 = vmatmul.mubr.f32.gmra.mxu0 %v201
        %v344 = vpop.f32.mrf.mxu0
        %v345 = vadd.f32 0.0, %v344
        %v346 = vpop.f32.mrf.mxu0
        %v347 = vadd.f32 0.0, %v346
        %348 = vmatprep.mubr.f32.mxu0 0.0
        %349 = vmatmul.mubr.f32.gmra.mxu0 %v204
        %v350 = vpop.f32.mrf.mxu0
        %v351 = vadd.f32 0.0, %v350
        %v352 = vpop.f32.mrf.mxu0
        %v353 = vadd.f32 0.0, %v352
        %354 = vmatprep.mubr.f32.mxu0 0.0
        %355 = vmatmul.mubr.f32.gmra.mxu0 %v207
        %v356 = vpop.f32.mrf.mxu0
        %v357 = vadd.f32 0.0, %v356
        %v358 = vpop.f32.mrf.mxu0
        %v359 = vadd.f32 0.0, %v358
        %360 = vmatprep.mubr.f32.mxu0 0.0
        %361 = vmatmul.mubr.f32.gmra.mxu0 %v210
        %v362 = vpop.f32.mrf.mxu0
        %v363 = vadd.f32 0.0, %v362
        %v364 = vpop.f32.mrf.mxu0
        %v365 = vadd.f32 0.0, %v364
        %366 = vmatprep.mubr.f32.mxu0 0.0
        %367 = vmatmul.mubr.f32.gmra.mxu0 %v213
        %v368 = vpop.f32.mrf.mxu0
        %v369 = vadd.f32 0.0, %v368
        %v370 = vpop.f32.mrf.mxu0
        %v371 = vadd.f32 0.0, %v370
        %372 = vmatprep.mubr.f32.mxu0 0.0
        %373 = vmatmul.mubr.f32.gmra.mxu0 %v216
        %v374 = vpop.f32.mrf.mxu0
        %v375 = vadd.f32 0.0, %v374
        %v376 = vpop.f32.mrf.mxu0
        %v377 = vadd.f32 0.0, %v376
        %378 = vdwg.mxu0
        %379 = vst [vmem:[%s137] sm:$0xff] %v285
        %380 = vst [vmem:[%s137 + $0x8] sm:$0xff] %v287
        %381 = vst [vmem:[%s137 + $0x10] sm:$0xff] %v291
        %382 = vst [vmem:[%s137 + $0x18] sm:$0xff] %v293
        %383 = vst [vmem:[%s137 + $0x20] sm:$0xff] %v297
        %384 = vst [vmem:[%s137 + $0x28] sm:$0xff] %v299
        %385 = vst [vmem:[%s137 + $0x30] sm:$0xff] %v303
        %386 = vst [vmem:[%s137 + $0x38] sm:$0xff] %v305
        %387 = vst [vmem:[%s137 + $0x40] sm:$0xff] %v309
        %388 = vst [vmem:[%s137 + $0x48] sm:$0xff] %v311
        %389 = vst [vmem:[%s137 + $0x50] sm:$0xff] %v315
        %390 = vst [vmem:[%s137 + $0x58] sm:$0xff] %v317
        %391 = vst [vmem:[%s137 + $0x60] sm:$0xff] %v321
        %392 = vst [vmem:[%s137 + $0x68] sm:$0xff] %v323
        %393 = vst [vmem:[%s137 + $0x70] sm:$0xff] %v327
        %394 = vst [vmem:[%s137 + $0x78] sm:$0xff] %v329
        %395 = vst [vmem:[%s137 + $0x80] sm:$0xff] %v333
        %396 = vst [vmem:[%s137 + $0x88] sm:$0xff] %v335
        %397 = vst [vmem:[%s137 + $0x90] sm:$0xff] %v339
        %398 = vst [vmem:[%s137 + $0x98] sm:$0xff] %v341
        %399 = vst [vmem:[%s137 + $0xa0] sm:$0xff] %v345
        %400 = vst [vmem:[%s137 + $0xa8] sm:$0xff] %v347
        %401 = vst [vmem:[%s137 + $0xb0] sm:$0xff] %v351
        %402 = vst [vmem:[%s137 + $0xb8] sm:$0xff] %v353
        %403 = vst [vmem:[%s137 + $0xc0] sm:$0xff] %v357
        %404 = vst [vmem:[%s137 + $0xc8] sm:$0xff] %v359
        %405 = vst [vmem:[%s137 + $0xd0] sm:$0xff] %v363
        %406 = vst [vmem:[%s137 + $0xd8] sm:$0xff] %v365
        %407 = vst [vmem:[%s137 + $0xe0] sm:$0xff] %v369
        %408 = vst [vmem:[%s137 + $0xe8] sm:$0xff] %v371
        %409 = vst [vmem:[%s137 + $0xf0] sm:$0xff] %v375
        %410 = vst [vmem:[%s137 + $0xf8] sm:$0xff] %v377
        %s411 = sand.u32 %s71, 1
        %s412 = scalar_lea.sflag [#allocation3], %s411
        %s413 = sand.u32 %s71, 1
        %s414 = smul.addr %s413, 256
        %s415 = scalar_lea.vmem [#allocation2], %s414
        // Predicated region
        $region29: #{tpu_custom_call.1} parent=27 // pred_check
          %p416 = pneg %p81
        $region30: #{tpu_custom_call.1} parent=27 // pred_check_branch
          %418 = sbr.rel (%p416) target = $region32
        $region31: #{tpu_custom_call.1} parent=27 // pred_region
          %s419 = smul.u32 16, %s16
          %s421 = ssub.s32 4096, 4096
          %422 = vsyncadd %s412, %s421
          %s423 = smul.addr %s419, 2
          %s424 = smul.addr %s423, 128
          %s425 = scalar_lea.hbm %s2, %s424
          %s426 = sshll.u32 %s415, 4
          %s427 = int_to_ptr.vmem [resolvable:$true] %s426
          %432 = dma.vmem_to_hbm [thread:$0]  %s427, 4096, %s425, %s412, 256, 256, 16
        $region32: #{tpu_custom_call.1} parent=27 // pred_fallthru
          _
      $region28: #{tpu_custom_call.1} parent=5 // pred_fallthru
        _
      %p433 = scmp.le.s32.totalorder 2, %s11
      // Predicated region
      $region33: #{tpu_custom_call.1} parent=5 // pred_check
        %p434 = pneg %p433
      $region34: #{tpu_custom_call.1} parent=5 // pred_check_branch
        %436 = sbr.rel (%p434) target = $region36
      $region35: #{tpu_custom_call.1} parent=5 // pred_region
        %s437 = ssub.s32 %s11, 2
        // Predicated region
        $region37: #{tpu_custom_call.1} parent=35 // pred_check
          %p438 = pneg %p87
        $region38: #{tpu_custom_call.1} parent=35 // pred_check_branch
          %440 = sbr.rel (%p438) target = $region40
        $region39: #{tpu_custom_call.1} parent=35 // pred_region
          %s441 = sand.u32 %s72, 1
          %s442 = scalar_lea.sflag [#allocation3], %s441
          %s443 = sand.u32 %s72, 1
          %s444 = smul.addr %s443, 256
          %s445 = scalar_lea.vmem [#allocation2], %s444
          %446 = dma.done %s442, 4096
        $region40: #{tpu_custom_call.1} parent=35 // pred_fallthru
          _
      $region36: #{tpu_custom_call.1} parent=5 // pred_fallthru
        _
    $region6: #{tpu_custom_call.1} parent=1 // loop_footer
      %s15 = sadd.s32 1, %s11
    $region7: #{tpu_custom_call.1} parent=1 // loop_footer_branch
      %10 = sbr.rel target = $region3
    $region8: #{tpu_custom_call.1} parent=1 // loop_exit
      _
    %447 = vsyncpa [#allocation3], 1
    %s448 = scalar_lea.sflag [#allocation3], 1
    %449 = vsyncpa %s448, 1

</llo_original>
